<compile_context>
chip_gen: v6e
topology: v6e:2x2x1
jax: 0.10.0
libtpu: 0.0.40
codegen_flags: <defaults>
</compile_context>

<pallas_src>
import functools

import jax
import jax.numpy as jnp
from jax.experimental import pallas as pl
from jax.experimental.pallas import tpu as pltpu

LOG_STD_MIN = -20.0
LOG_STD_MAX = 2.0


def _round_up(x, m):
    return ((x + m - 1) // m) * m


def _policy_kernel(x_ref, w1_ref, b1_ref, w2_ref, b2_ref, wh_ref, bh_ref,
                   lo_ref, hi_ref, out_ref):
    """One batch tile: 2 hidden layers + fused (mean||log_std) head.

    The log_std clamp is expressed as per-column clamp bounds (lo/hi), so the
    epilogue is just max + min on the output slab.
    """
    x = x_ref[...]

    # linear1 + ReLU (f32 accumulate, f32 elementwise)
    h1 = jnp.dot(x, w1_ref[...], preferred_element_type=jnp.float32) + b1_ref[...]
    h1 = jnp.maximum(h1, 0.0)

    # linear2 + ReLU
    h2 = jnp.dot(h1.astype(w2_ref.dtype), w2_ref[...],
                 preferred_element_type=jnp.float32) + b2_ref[...]
    h2 = jnp.maximum(h2, 0.0)

    # fused heads: columns [0, A) = mean, [A, 2A) = log_std, rest = padding
    heads = jnp.dot(h2.astype(wh_ref.dtype), wh_ref[...],
                    preferred_element_type=jnp.float32) + bh_ref[...]

    # per-column clamp (only the log_std columns have finite bounds)
    out = jnp.minimum(jnp.maximum(heads, lo_ref[...]), hi_ref[...])
    out_ref[...] = out.astype(out_ref.dtype)


def prepare_params(params, *, compute_dtype=jnp.bfloat16):
    """One-time weight prep (per params change), hoisted off the hot path.

    Fuses the mean/log_std heads, zero-pads hidden and head dims to 128
    multiples, casts MXU operands to compute_dtype, and builds the per-column
    clamp bound vectors. Biases / clamp bounds stay f32 (elementwise path).
    """
    num_inputs, H = params["w1"].shape
    A = params["wm"].shape[1]
    Hp = _round_up(H, 128)
    P = _round_up(2 * A, 128)

    w1 = jnp.pad(params["w1"], ((0, 0), (0, Hp - H)))
    b1 = jnp.pad(params["b1"], ((0, 0), (0, Hp - H)))
    w2 = jnp.pad(params["w2"], ((0, Hp - H), (0, Hp - H)))
    b2 = jnp.pad(params["b2"], ((0, 0), (0, Hp - H)))

    wh = jnp.concatenate([params["wm"], params["ws"]], axis=1)   # (H, 2A)
    bh = jnp.concatenate([params["bm"], params["bs"]], axis=1)   # (1, 2A)
    wh = jnp.pad(wh, ((0, Hp - H), (0, P - 2 * A)))
    bh = jnp.pad(bh, ((0, 0), (0, P - 2 * A)))

    col = jnp.arange(P)[None, :]
    is_log_std = (col >= A) & (col < 2 * A)
    lo = jnp.where(is_log_std, LOG_STD_MIN, -jnp.inf).astype(jnp.float32)
    hi = jnp.where(is_log_std, LOG_STD_MAX, jnp.inf).astype(jnp.float32)

    return {
        "w1": w1.astype(compute_dtype),
        "b1": b1.astype(jnp.float32),
        "w2": w2.astype(compute_dtype),
        "b2": b2.astype(jnp.float32),
        "wh": wh.astype(compute_dtype),
        "bh": bh.astype(jnp.float32),
        "lo": lo,
        "hi": hi,
        "num_inputs": num_inputs,
        "H": H,
        "Hp": Hp,
        "A": A,
        "P": P,
        "compute_dtype": jnp.dtype(compute_dtype),
    }


def _choose_tile(B, block_batch, sublane_align):
    """Batch tile size + padded batch. Ensures >=2 grid steps when possible
    so both v7x TensorCores participate under dimension_semantics='parallel'."""
    block_batch = max(256, _round_up(block_batch, 256))
    B_al = _round_up(max(B, sublane_align), sublane_align)
    if B_al > block_batch:
        TB = block_batch
    elif B_al >= 2 * sublane_align:
        TB = _round_up(pl.cdiv(B_al, 2), sublane_align)
    else:
        TB = B_al
    B_pad = _round_up(B_al, TB)
    return TB, B_pad


def policy_forward(state, prep, *, block_batch=1024, out_dtype=jnp.float32):
    """Full PolicyNetwork.forward in one Pallas kernel.

    state: (B, num_inputs) float32
    prep:  output of prepare_params (padded / fused / cast weights)
    out_dtype: dtype of the output slab written back to HBM (f32 default;
               bf16 halves writeback traffic on v5e if acceptable downstream).
    returns: (mean (B, A), log_std (B, A)) in out_dtype.
    """
    B, num_inputs = state.shape
    assert num_inputs == prep["num_inputs"]
    compute_dtype = prep["compute_dtype"]
    Hp, A, P = prep["Hp"], prep["A"], prep["P"]

    # bf16 packs 2 rows / sublane -> 16-row alignment; f32 -> 8.
    sublane_align = 8 if compute_dtype.itemsize >= 4 else 16
    TB, B_pad = _choose_tile(B, block_batch, sublane_align)

    x = state.astype(compute_dtype)
    if B_pad > B:
        x = jnp.pad(x, ((0, B_pad - B), (0, 0)))

    grid = (B_pad // TB,)

    def batch_map(i):
        return (i, 0)

    def resident_map(i):
        return (0, 0)

    # Constant-index operands: single-buffered, stay VMEM-resident.
    resident = functools.partial(pl.BlockSpec, index_map=resident_map,
                                 pipeline_mode=pl.Buffered(1))
    in_specs = [
        pl.BlockSpec((TB, num_inputs), batch_map),   # state: streams per tile
        resident((num_inputs, Hp)),                  # w1
        resident((1, Hp)),                           # b1
        resident((Hp, Hp)),                          # w2
        resident((1, Hp)),                           # b2
        resident((Hp, P)),                           # fused head weights
        resident((1, P)),                            # fused head bias
        resident((1, P)),                            # clamp lo
        resident((1, P)),                            # clamp hi
    ]
    out_specs = pl.BlockSpec((TB, P), batch_map)     # lane-dense output slab

    # VMEM budget from actual buffers: 1x residents + 2x streamed + headroom,
    # clamped to a v7x-safe ceiling (64 MiB physical per TensorCore).
    w_isz = compute_dtype.itemsize
    o_isz = jnp.dtype(out_dtype).itemsize
    resident_bytes = ((num_inputs * Hp + Hp * Hp + Hp * P) * w_isz
                      + (2 * Hp + 3 * P) * 4)
    streamed_bytes = 2 * TB * num_inputs * w_isz + 2 * TB * P * o_isz
    vmem_limit = int(min(max((resident_bytes + streamed_bytes) * 5 // 4
                             + (4 << 20), 16 << 20), 60 << 20))

    flops = 2 * B_pad * (num_inputs * Hp + Hp * Hp + Hp * P)
    bytes_accessed = (B_pad * num_inputs * w_isz
                      + resident_bytes
                      + B_pad * P * o_isz)

    out = pl.pallas_call(
        _policy_kernel,
        out_shape=jax.ShapeDtypeStruct((B_pad, P), out_dtype),
        grid=grid,
        in_specs=in_specs,
        out_specs=out_specs,
        compiler_params=pltpu.CompilerParams(
            dimension_semantics=("parallel",),        # megacore on v7x
            vmem_limit_bytes=vmem_limit,
        ),
        cost_estimate=pl.CostEstimate(
            flops=flops, transcendentals=0, bytes_accessed=bytes_accessed),
    )(x, prep["w1"], prep["b1"], prep["w2"], prep["b2"],
      prep["wh"], prep["bh"], prep["lo"], prep["hi"])

    # Padded batch rows / head columns carry garbage by construction -- the
    # slicing below is what keeps the result correct.
    mean = out[:B, :A]
    log_std = out[:B, A:2 * A]
    return mean, log_std


def policy_forward_from_params(state, params, *, compute_dtype=jnp.bfloat16,
                               block_batch=1024, out_dtype=jnp.float32):
    """Convenience wrapper: prep + forward (prefer caching prepare_params)."""
    prep = prepare_params(params, compute_dtype=compute_dtype)
    return policy_forward(state, prep, block_batch=block_batch,
                          out_dtype=out_dtype)


def init_params(key, num_inputs, num_actions, hidden_size, init_w=0.003):
    """Deterministic parameter init mirroring the PyTorch module's __init__.

    linear1/linear2 use PyTorch's default U(-1/sqrt(fan_in), 1/sqrt(fan_in));
    mean/log_std heads use U(-init_w, init_w). Weights stored as (in, out).
    """
    ks = jax.random.split(key, 8)

    def uni(k, shape, bound):
        return jax.random.uniform(k, shape, jnp.float32, -bound, bound)

    b1_bound = 1.0 / jnp.sqrt(num_inputs)
    b2_bound = 1.0 / jnp.sqrt(hidden_size)
    return {
        "w1": uni(ks[0], (num_inputs, hidden_size), b1_bound),
        "b1": uni(ks[1], (1, hidden_size), b1_bound),
        "w2": uni(ks[2], (hidden_size, hidden_size), b2_bound),
        "b2": uni(ks[3], (1, hidden_size), b2_bound),
        "wm": uni(ks[4], (hidden_size, num_actions), init_w),
        "bm": uni(ks[5], (1, num_actions), init_w),
        "ws": uni(ks[6], (hidden_size, num_actions), init_w),
        "bs": uni(ks[7], (1, num_actions), init_w),
    }


def _reference_forward(state, p):
    h1 = jnp.maximum(state @ p["w1"] + p["b1"], 0.0)
    h2 = jnp.maximum(h1 @ p["w2"] + p["b2"], 0.0)
    mean = h2 @ p["wm"] + p["bm"]
    log_std = jnp.clip(h2 @ p["ws"] + p["bs"], LOG_STD_MIN, LOG_STD_MAX)
    return mean, log_std


# TODO(synk): evaluate()/get_action() sampling (Normal.sample, tanh squash,
# log-prob correction) are host-side policy utilities, not part of forward();
# they are intentionally not implemented in the kernel.

if __name__ == "__main__":
    num_inputs, num_actions, hidden_size = 16, 8, 32

    key = jax.random.PRNGKey(0)
    pkey, skey, skey2 = jax.random.split(key, 3)

    params = init_params(pkey, num_inputs, num_actions, hidden_size)

    # --- small batch, exact-parity check with f32 MXU operands
    state = jax.random.normal(skey, (2, num_inputs), jnp.float32)
    ref_mean, ref_log_std = _reference_forward(state, params)

    prep_f32 = prepare_params(params, compute_dtype=jnp.float32)
    mean32, log_std32 = policy_forward(state, prep_f32)
    jax.block_until_ready((mean32, log_std32))
    assert mean32.shape == (2, num_actions)
    assert log_std32.shape == (2, num_actions)
    assert jnp.allclose(mean32, ref_mean, atol=1e-3, rtol=1e-3), "f32 mean mismatch"
    assert jnp.allclose(log_std32, ref_log_std, atol=1e-3, rtol=1e-3), "f32 log_std mismatch"

    # --- larger batch: exercises >=2 grid steps and batch padding/slicing
    state_b = jax.random.normal(skey2, (50, num_inputs), jnp.float32)
    ref_mean_b, ref_log_std_b = _reference_forward(state_b, params)
    mean_b, log_std_b = policy_forward(state_b, prep_f32)
    jax.block_until_ready((mean_b, log_std_b))
    assert mean_b.shape == (50, num_actions)
    assert jnp.allclose(mean_b, ref_mean_b, atol=1e-3, rtol=1e-3), "batched mean mismatch"
    assert jnp.allclose(log_std_b, ref_log_std_b, atol=1e-3, rtol=1e-3), "batched log_std mismatch"

    # --- bf16-fed MXU path (v6e/v7x peak), f32 accumulate. Activations are
    # also fed in bf16 to the 2nd/3rd matmuls -> documented loose tolerance.
    prep_bf16 = prepare_params(params, compute_dtype=jnp.bfloat16)
    mean_bf, log_std_bf = policy_forward(state, prep_bf16)
    jax.block_until_ready((mean_bf, log_std_bf))
    assert jnp.allclose(mean_bf, ref_mean, atol=3e-2, rtol=3e-2), "bf16 mean mismatch"
    assert jnp.allclose(log_std_bf, ref_log_std, atol=3e-2, rtol=3e-2), "bf16 log_std mismatch"

    print("KERNEL_OK")
</pallas_src>

<mosaic_0001>
module attributes {stable_mosaic.version = 11 : i64} {
  func.func @_policy_kernel(%arg0: i32, %arg1: memref<8x16xf32, #tpu.memory_space<vmem>>, %arg2: memref<16x128xf32, #tpu.memory_space<vmem>>, %arg3: memref<1x128xf32, #tpu.memory_space<vmem>>, %arg4: memref<128x128xf32, #tpu.memory_space<vmem>>, %arg5: memref<1x128xf32, #tpu.memory_space<vmem>>, %arg6: memref<128x128xf32, #tpu.memory_space<vmem>>, %arg7: memref<1x128xf32, #tpu.memory_space<vmem>>, %arg8: memref<1x128xf32, #tpu.memory_space<vmem>>, %arg9: memref<1x128xf32, #tpu.memory_space<vmem>>, %arg10: memref<8x128xf32, #tpu.memory_space<vmem>>) attributes {dimension_semantics = [#tpu.dimension_semantics<parallel>], iteration_bounds = array<i64: 1>, scalar_prefetch = 0 : i64, scratch_operands = 0 : i64, tpu.core_type = #tpu.core_type<tc>, window_params = [{transform_indices = @transform_0, window_bounds = array<i64: 8, 16>}, {pipeline_mode = #tpu.pipeline_mode<synchronous>, transform_indices = @transform_1, window_bounds = array<i64: 16, 128>}, {pipeline_mode = #tpu.pipeline_mode<synchronous>, transform_indices = @transform_2, window_bounds = array<i64: 1, 128>}, {pipeline_mode = #tpu.pipeline_mode<synchronous>, transform_indices = @transform_3, window_bounds = array<i64: 128, 128>}, {pipeline_mode = #tpu.pipeline_mode<synchronous>, transform_indices = @transform_4, window_bounds = array<i64: 1, 128>}, {pipeline_mode = #tpu.pipeline_mode<synchronous>, transform_indices = @transform_5, window_bounds = array<i64: 128, 128>}, {pipeline_mode = #tpu.pipeline_mode<synchronous>, transform_indices = @transform_6, window_bounds = array<i64: 1, 128>}, {pipeline_mode = #tpu.pipeline_mode<synchronous>, transform_indices = @transform_7, window_bounds = array<i64: 1, 128>}, {pipeline_mode = #tpu.pipeline_mode<synchronous>, transform_indices = @transform_8, window_bounds = array<i64: 1, 128>}, {transform_indices = @transform_9, window_bounds = array<i64: 8, 128>}]} {
    %c0 = arith.constant 0 : index
    %c0_0 = arith.constant 0 : index
    %0 = vector.load %arg1[%c0, %c0_0] : memref<8x16xf32, #tpu.memory_space<vmem>>, vector<8x16xf32>
    %c0_1 = arith.constant 0 : index
    %c0_2 = arith.constant 0 : index
    %1 = vector.load %arg2[%c0_1, %c0_2] : memref<16x128xf32, #tpu.memory_space<vmem>>, vector<16x128xf32>
    %cst = arith.constant dense<0.000000e+00> : vector<8x128xf32>
    %2 = tpu.matmul %0, %1, %cst {dimension_numbers = #tpu.dot_dimension_numbers<[1], [0], [0], [1], [0, 0, 1, 1], [], []>} : vector<8x16xf32>, vector<16x128xf32>, vector<8x128xf32> -> vector<8x128xf32>
    %c0_3 = arith.constant 0 : index
    %c0_4 = arith.constant 0 : index
    %3 = vector.load %arg3[%c0_3, %c0_4] : memref<1x128xf32, #tpu.memory_space<vmem>>, vector<1x128xf32>
    %4 = vector.broadcast %3 : vector<1x128xf32> to vector<8x128xf32>
    %5 = arith.addf %2, %4 : vector<8x128xf32>
    %cst_5 = arith.constant 0.000000e+00 : f32
    %6 = vector.broadcast %cst_5 : f32 to vector<8x128xf32>
    %7 = arith.maximumf %5, %6 : vector<8x128xf32>
    %c0_6 = arith.constant 0 : index
    %c0_7 = arith.constant 0 : index
    %8 = vector.load %arg4[%c0_6, %c0_7] : memref<128x128xf32, #tpu.memory_space<vmem>>, vector<128x128xf32>
    %cst_8 = arith.constant dense<0.000000e+00> : vector<8x128xf32>
    %9 = tpu.matmul %7, %8, %cst_8 {dimension_numbers = #tpu.dot_dimension_numbers<[1], [0], [0], [1], [0, 0, 1, 1], [], []>} : vector<8x128xf32>, vector<128x128xf32>, vector<8x128xf32> -> vector<8x128xf32>
    %c0_9 = arith.constant 0 : index
    %c0_10 = arith.constant 0 : index
    %10 = vector.load %arg5[%c0_9, %c0_10] : memref<1x128xf32, #tpu.memory_space<vmem>>, vector<1x128xf32>
    %11 = vector.broadcast %10 : vector<1x128xf32> to vector<8x128xf32>
    %12 = arith.addf %9, %11 : vector<8x128xf32>
    %cst_11 = arith.constant 0.000000e+00 : f32
    %13 = vector.broadcast %cst_11 : f32 to vector<8x128xf32>
    %14 = arith.maximumf %12, %13 : vector<8x128xf32>
    %c0_12 = arith.constant 0 : index
    %c0_13 = arith.constant 0 : index
    %15 = vector.load %arg6[%c0_12, %c0_13] : memref<128x128xf32, #tpu.memory_space<vmem>>, vector<128x128xf32>
    %cst_14 = arith.constant dense<0.000000e+00> : vector<8x128xf32>
    %16 = tpu.matmul %14, %15, %cst_14 {dimension_numbers = #tpu.dot_dimension_numbers<[1], [0], [0], [1], [0, 0, 1, 1], [], []>} : vector<8x128xf32>, vector<128x128xf32>, vector<8x128xf32> -> vector<8x128xf32>
    %c0_15 = arith.constant 0 : index
    %c0_16 = arith.constant 0 : index
    %17 = vector.load %arg7[%c0_15, %c0_16] : memref<1x128xf32, #tpu.memory_space<vmem>>, vector<1x128xf32>
    %18 = vector.broadcast %17 : vector<1x128xf32> to vector<8x128xf32>
    %19 = arith.addf %16, %18 : vector<8x128xf32>
    %c0_17 = arith.constant 0 : index
    %c0_18 = arith.constant 0 : index
    %20 = vector.load %arg8[%c0_17, %c0_18] : memref<1x128xf32, #tpu.memory_space<vmem>>, vector<1x128xf32>
    %21 = vector.broadcast %20 : vector<1x128xf32> to vector<8x128xf32>
    %22 = arith.maximumf %19, %21 : vector<8x128xf32>
    %c0_19 = arith.constant 0 : index
    %c0_20 = arith.constant 0 : index
    %23 = vector.load %arg9[%c0_19, %c0_20] : memref<1x128xf32, #tpu.memory_space<vmem>>, vector<1x128xf32>
    %24 = vector.broadcast %23 : vector<1x128xf32> to vector<8x128xf32>
    %25 = arith.minimumf %22, %24 : vector<8x128xf32>
    %c0_21 = arith.constant 0 : index
    %c0_22 = arith.constant 0 : index
    %26 = vector.load %arg10[%c0_21, %c0_22] : memref<8x128xf32, #tpu.memory_space<vmem>>, vector<8x128xf32>
    tpu.vector_store %arg10[%c0_21, %c0_22], %25 {strides = array<i32>} : memref<8x128xf32, #tpu.memory_space<vmem>>, vector<8x128xf32>,
    return
  }
  func.func @transform_0(%arg0: i32) -> (i32, i32) {
    %c0_i32 = arith.constant 0 : i32
    %c0_i32_0 = arith.constant 0 : i32
    return %arg0, %c0_i32 : i32, i32
  }
  func.func @transform_1(%arg0: i32) -> (i32, i32) {
    %c0_i32 = arith.constant 0 : i32
    %c0_i32_0 = arith.constant 0 : i32
    %c0_i32_1 = arith.constant 0 : i32
    return %c0_i32, %c0_i32_0 : i32, i32
  }
  func.func @transform_2(%arg0: i32) -> (i32, i32) {
    %c0_i32 = arith.constant 0 : i32
    %c0_i32_0 = arith.constant 0 : i32
    %c0_i32_1 = arith.constant 0 : i32
    return %c0_i32, %c0_i32_0 : i32, i32
  }
  func.func @transform_3(%arg0: i32) -> (i32, i32) {
    %c0_i32 = arith.constant 0 : i32
    %c0_i32_0 = arith.constant 0 : i32
    %c0_i32_1 = arith.constant 0 : i32
    return %c0_i32, %c0_i32_0 : i32, i32
  }
  func.func @transform_4(%arg0: i32) -> (i32, i32) {
    %c0_i32 = arith.constant 0 : i32
    %c0_i32_0 = arith.constant 0 : i32
    %c0_i32_1 = arith.constant 0 : i32
    return %c0_i32, %c0_i32_0 : i32, i32
  }
  func.func @transform_5(%arg0: i32) -> (i32, i32) {
    %c0_i32 = arith.constant 0 : i32
    %c0_i32_0 = arith.constant 0 : i32
    %c0_i32_1 = arith.constant 0 : i32
    return %c0_i32, %c0_i32_0 : i32, i32
  }
  func.func @transform_6(%arg0: i32) -> (i32, i32) {
    %c0_i32 = arith.constant 0 : i32
    %c0_i32_0 = arith.constant 0 : i32
    %c0_i32_1 = arith.constant 0 : i32
    return %c0_i32, %c0_i32_0 : i32, i32
  }
  func.func @transform_7(%arg0: i32) -> (i32, i32) {
    %c0_i32 = arith.constant 0 : i32
    %c0_i32_0 = arith.constant 0 : i32
    %c0_i32_1 = arith.constant 0 : i32
    return %c0_i32, %c0_i32_0 : i32, i32
  }
  func.func @transform_8(%arg0: i32) -> (i32, i32) {
    %c0_i32 = arith.constant 0 : i32
    %c0_i32_0 = arith.constant 0 : i32
    %c0_i32_1 = arith.constant 0 : i32
    return %c0_i32, %c0_i32_0 : i32, i32
  }
  func.func @transform_9(%arg0: i32) -> (i32, i32) {
    %c0_i32 = arith.constant 0 : i32
    %c0_i32_0 = arith.constant 0 : i32
    return %arg0, %c0_i32 : i32, i32
  }
}

</mosaic_0001>

<llo_original>
// kernel: tpu_custom_call.1
$region0: #{tpu_custom_call.1}
  #allocation0 [shape = 'u32[]', space=smem, size = 0x4, offset = 0x4, fixed_abs, tag = 'smem constant byte address 0x4 - core index']
  #allocation1 [shape = 'u32[144,128]{1,0:T(1,128)}', space=vmem, size = 0x12000, scoped, tag = 'internal scratch']
  %s0 = inlined_call_operand.hbm [shape: f32[8,16], index: 0, kind: input, shape index: {}]
  %s1 = inlined_call_operand.hbm [shape: f32[16,128], index: 1, kind: input, shape index: {}]
  %s2 = inlined_call_operand.vmem [shape: f32[1,128], index: 2, kind: input, shape index: {}]
  %s3 = inlined_call_operand.hbm [shape: f32[128,128], index: 3, kind: input, shape index: {}]
  %s4 = inlined_call_operand.vmem [shape: f32[1,128], index: 4, kind: input, shape index: {}]
  %s5 = inlined_call_operand.hbm [shape: f32[128,128], index: 5, kind: input, shape index: {}]
  %s6 = inlined_call_operand.vmem [shape: f32[1,128], index: 6, kind: input, shape index: {}]
  %s7 = inlined_call_operand.vmem [shape: f32[1,128], index: 7, kind: input, shape index: {}]
  %s8 = inlined_call_operand.vmem [shape: f32[1,128], index: 8, kind: input, shape index: {}]
  %s9 = inlined_call_operand.hbm [shape: f32[8,128], index: 9, kind: output, shape index: {}]
  %s10 = sld [smem:[#allocation0]]
  $region62: #{tpu_custom_call.1} parent=0
    _
  %s12 = ssub.s32 1, %s10
  %s13 = scalar_select 0, %s12, %s10
  $region1: #{tpu_custom_call.1} parent=0
    #allocation2 [shape = 'u8[4096]{0}', space=vmem, size = 0x1000, scoped, tag = 'input window, operand 0, single buffered']
    #allocation3 [shape = 's32[1]{0}', space=sflag, size = 0x4, scoped, tag = 'scoped memory for tpu_custom_call.1']
    #allocation4 [shape = 's32[1]{0}', space=sflag, size = 0x4, scoped, tag = 'scoped memory for tpu_custom_call.1']
    #allocation5 [shape = 'u8[8192]{0}', space=vmem, size = 0x2000, scoped, tag = 'input window, operand 1, single buffered']
    #allocation6 [shape = 's32[1]{0}', space=sflag, size = 0x4, scoped, tag = 'scoped memory for tpu_custom_call.1']
    #allocation7 [shape = 'u8[65536]{0}', space=vmem, size = 0x10000, scoped, tag = 'input window, operand 3, single buffered']
    #allocation8 [shape = 'u8[65536]{0}', space=vmem, size = 0x10000, scoped, tag = 'input window, operand 5, single buffered']
    #allocation9 [shape = 's32[1]{0}', space=sflag, size = 0x4, scoped, tag = 'scoped memory for tpu_custom_call.1']
    #allocation10 [shape = 'u8[4096]{0}', space=vmem, size = 0x1000, scoped, tag = 'output window, operand 0, single buffered']
    %14 = vsyncpa [#allocation3], 0
    %15 = vsyncpa [#allocation6], 0
    %16 = vsyncpa [#allocation9], 0
    %17 = vsyncpa [#allocation4], 0
    // Predicated region
    $region2: #{tpu_custom_call.1} parent=1 // pred_check
      _
    $region3: #{tpu_custom_call.1} parent=1 // pred_check_branch
      %19 = sbr.rel (0) target = $region5
    $region4: #{tpu_custom_call.1} parent=1 // pred_region
      %s21 = ssub.s32 128, 128
      %22 = vsyncadd [#allocation3], %s21
      %s24 = sshll.u32 [#allocation2], 4
      %s25 = int_to_ptr.vmem [resolvable:$true] %s24
      %27 = dma.hbm_to_vmem [thread:$0]  %s0, 128, %s25, [#allocation3]
    $region5: #{tpu_custom_call.1} parent=1 // pred_fallthru
      _
    // Predicated region
    $region6: #{tpu_custom_call.1} parent=1 // pred_check
      _
    $region7: #{tpu_custom_call.1} parent=1 // pred_check_branch
      %29 = sbr.rel (0) target = $region9
    $region8: #{tpu_custom_call.1} parent=1 // pred_region
      %s31 = ssub.s32 256, 256
      %32 = vsyncadd [#allocation6], %s31
      %s33 = sshll.u32 [#allocation5], 4
      %s34 = int_to_ptr.vmem [resolvable:$true] %s33
      %39 = dma.hbm_to_vmem [thread:$0]  %s1, 256, %s34, [#allocation6], 128, 128, 8
    $region9: #{tpu_custom_call.1} parent=1 // pred_fallthru
      _
    // Predicated region
    $region10: #{tpu_custom_call.1} parent=1 // pred_check
      _
    $region11: #{tpu_custom_call.1} parent=1 // pred_check_branch
      %41 = sbr.rel (0) target = $region13
    $region12: #{tpu_custom_call.1} parent=1 // pred_region
      _
    $region13: #{tpu_custom_call.1} parent=1 // pred_fallthru
      _
    // Predicated region
    $region14: #{tpu_custom_call.1} parent=1 // pred_check
      _
    $region15: #{tpu_custom_call.1} parent=1 // pred_check_branch
      %43 = sbr.rel (0) target = $region17
    $region16: #{tpu_custom_call.1} parent=1 // pred_region
      %s45 = ssub.s32 2048, 2048
      %46 = vsyncadd [#allocation6], %s45
      %s47 = sshll.u32 [#allocation7], 4
      %s48 = int_to_ptr.vmem [resolvable:$true] %s47
      %53 = dma.hbm_to_vmem [thread:$0]  %s3, 2048, %s48, [#allocation6], 128, 128, 8
    $region17: #{tpu_custom_call.1} parent=1 // pred_fallthru
      _
    // Predicated region
    $region18: #{tpu_custom_call.1} parent=1 // pred_check
      _
    $region19: #{tpu_custom_call.1} parent=1 // pred_check_branch
      %55 = sbr.rel (0) target = $region21
    $region20: #{tpu_custom_call.1} parent=1 // pred_region
      _
    $region21: #{tpu_custom_call.1} parent=1 // pred_fallthru
      _
    // Predicated region
    $region22: #{tpu_custom_call.1} parent=1 // pred_check
      _
    $region23: #{tpu_custom_call.1} parent=1 // pred_check_branch
      %57 = sbr.rel (0) target = $region25
    $region24: #{tpu_custom_call.1} parent=1 // pred_region
      %s59 = ssub.s32 2048, 2048
      %60 = vsyncadd [#allocation9], %s59
      %s61 = sshll.u32 [#allocation8], 4
      %s62 = int_to_ptr.vmem [resolvable:$true] %s61
      %67 = dma.hbm_to_vmem [thread:$0]  %s5, 2048, %s62, [#allocation9], 128, 128, 8
    $region25: #{tpu_custom_call.1} parent=1 // pred_fallthru
      _
    // Predicated region
    $region26: #{tpu_custom_call.1} parent=1 // pred_check
      _
    $region27: #{tpu_custom_call.1} parent=1 // pred_check_branch
      %69 = sbr.rel (0) target = $region29
    $region28: #{tpu_custom_call.1} parent=1 // pred_region
      _
    $region29: #{tpu_custom_call.1} parent=1 // pred_fallthru
      _
    // Predicated region
    $region30: #{tpu_custom_call.1} parent=1 // pred_check
      _
    $region31: #{tpu_custom_call.1} parent=1 // pred_check_branch
      %71 = sbr.rel (0) target = $region33
    $region32: #{tpu_custom_call.1} parent=1 // pred_region
      _
    $region33: #{tpu_custom_call.1} parent=1 // pred_fallthru
      _
    // Predicated region
    $region34: #{tpu_custom_call.1} parent=1 // pred_check
      _
    $region35: #{tpu_custom_call.1} parent=1 // pred_check_branch
      %73 = sbr.rel (0) target = $region37
    $region36: #{tpu_custom_call.1} parent=1 // pred_region
      _
    $region37: #{tpu_custom_call.1} parent=1 // pred_fallthru
      _
    // Predicated region
    $region38: #{tpu_custom_call.1} parent=1 // pred_check
      _
    $region39: #{tpu_custom_call.1} parent=1 // pred_check_branch
      %75 = sbr.rel (0) target = $region41
    $region40: #{tpu_custom_call.1} parent=1 // pred_region
      %76 = dma.done [#allocation3], 128
    $region41: #{tpu_custom_call.1} parent=1 // pred_fallthru
      _
    // Predicated region
    $region42: #{tpu_custom_call.1} parent=1 // pred_check
      _
    $region43: #{tpu_custom_call.1} parent=1 // pred_check_branch
      %78 = sbr.rel (0) target = $region45
    $region44: #{tpu_custom_call.1} parent=1 // pred_region
      %79 = dma.done [#allocation6], 256
    $region45: #{tpu_custom_call.1} parent=1 // pred_fallthru
      _
    // Predicated region
    $region46: #{tpu_custom_call.1} parent=1 // pred_check
      _
    $region47: #{tpu_custom_call.1} parent=1 // pred_check_branch
      %81 = sbr.rel (0) target = $region49
    $region48: #{tpu_custom_call.1} parent=1 // pred_region
      %82 = dma.done [#allocation6], 2048
    $region49: #{tpu_custom_call.1} parent=1 // pred_fallthru
      _
    // Predicated region
    $region50: #{tpu_custom_call.1} parent=1 // pred_check
      _
    $region51: #{tpu_custom_call.1} parent=1 // pred_check_branch
      %84 = sbr.rel (0) target = $region53
    $region52: #{tpu_custom_call.1} parent=1 // pred_region
      %85 = dma.done [#allocation9], 2048
    $region53: #{tpu_custom_call.1} parent=1 // pred_fallthru
      _
    %v86 = vld [vmem:[#allocation2] sm:$0xff]
    %v87 = vld [vmem:[#allocation5] sm:$0xff]
    %v88 = vld [vmem:[#allocation5 + $0x8] sm:$0xff]
    %v89 = vld [vmem:[%s2] sm:$0x1]
    %v91 = vlaneseq
    %v92 = vshrl.u32 %v91, 7
    %v93 = vsub.s32 0, %v92
    %v94 = vrot.slane %v89, %v93
    %vm96 = vcmask 130048
    %v98 = vsel %vm96, %v86, 0
    %100 = vmatprep.subr.mxu0 0.0
    %101 = vmatpush1.msra.mxu0 0.0
    %102 = vmatprep.subr.mxu0 0.0
    %103 = vmatpush1.msra.mxu0 0.0
    %104 = vmatprep.subr.mxu0 0.0
    %105 = vmatpush1.msra.mxu0 0.0
    %106 = vmatprep.subr.mxu0 0.0
    %107 = vmatpush1.msra.mxu0 0.0
    %108 = vmatprep.subr.mxu0 0.0
    %109 = vmatpush1.msra.mxu0 0.0
    %110 = vmatprep.subr.mxu0 0.0
    %111 = vmatpush1.msra.mxu0 0.0
    %112 = vmatprep.subr.mxu0 0.0
    %113 = vmatpush1.msra.mxu0 0.0
    %114 = vmatprep.subr.mxu0 0.0
    %115 = vmatpush1.msra.mxu0 0.0
    %116 = vmatprep.subr.mxu0 0.0
    %117 = vmatpush1.msra.mxu0 0.0
    %118 = vmatprep.subr.mxu0 0.0
    %119 = vmatpush1.msra.mxu0 0.0
    %120 = vmatprep.subr.mxu0 0.0
    %121 = vmatpush1.msra.mxu0 0.0
    %122 = vmatprep.subr.mxu0 0.0
    %123 = vmatpush1.msra.mxu0 0.0
    %124 = vmatprep.subr.mxu0 0.0
    %125 = vmatpush1.msra.mxu0 0.0
    %126 = vmatprep.subr.mxu0 0.0
    %127 = vmatpush1.msra.mxu0 0.0
    %128 = vmatprep.subr.mxu0 0.0
    %129 = vmatpush1.msra.mxu0 %v88
    %130 = vmatprep.subr.mxu0 0.0
    %131 = vmatpush1.msra.mxu0 %v87
    %132 = vmatprep.subr.mxu0 0.0
    %133 = vmatpush2.msra.mxu0 0.0
    %134 = vmatprep.subr.mxu0 0.0
    %135 = vmatpush2.msra.mxu0 0.0
    %136 = vmatprep.subr.mxu0 0.0
    %137 = vmatpush2.msra.mxu0 0.0
    %138 = vmatprep.subr.mxu0 0.0
    %139 = vmatpush2.msra.mxu0 0.0
    %140 = vmatprep.subr.mxu0 0.0
    %141 = vmatpush2.msra.mxu0 0.0
    %142 = vmatprep.subr.mxu0 0.0
    %143 = vmatpush2.msra.mxu0 0.0
    %144 = vmatprep.subr.mxu0 0.0
    %145 = vmatpush2.msra.mxu0 0.0
    %146 = vmatprep.subr.mxu0 0.0
    %147 = vmatpush2.msra.mxu0 0.0
    %148 = vmatprep.subr.mxu0 0.0
    %149 = vmatpush2.msra.mxu0 0.0
    %150 = vmatprep.subr.mxu0 0.0
    %151 = vmatpush2.msra.mxu0 0.0
    %152 = vmatprep.subr.mxu0 0.0
    %153 = vmatpush2.msra.mxu0 0.0
    %154 = vmatprep.subr.mxu0 0.0
    %155 = vmatpush2.msra.mxu0 0.0
    %156 = vmatprep.subr.mxu0 0.0
    %157 = vmatpush2.msra.mxu0 0.0
    %158 = vmatprep.subr.mxu0 0.0
    %159 = vmatpush2.msra.mxu0 0.0
    %160 = vmatprep.subr.mxu0 0.0
    %161 = vmatpush2.msra.mxu0 0.0
    %162 = vmatprep.subr.mxu0 0.0
    %163 = vmatpush2.msra.mxu0 0.0
    %164 = vmatprep.mubr.f32.mxu0 0.0
    %165 = vmatmul.mubr.f32.gmra.mxu0 %v98
    %v166 = vpop.f32.mrf.mxu0
    %v167 = vadd.f32 %v94, %v166
    %v168 = vpop.f32.mrf.mxu0
    %169 = vdwg.mxu0
    %v170 = vmax.f32 %v167, 0.0
    %v171 = vld [vmem:[#allocation7] sm:$0xff]
    %v172 = vld [vmem:[#allocation7 + $0x8] sm:$0xff]
    %v173 = vld [vmem:[#allocation7 + $0x10] sm:$0xff]
    %v174 = vld [vmem:[#allocation7 + $0x18] sm:$0xff]
    %v175 = vld [vmem:[#allocation7 + $0x20] sm:$0xff]
    %v176 = vld [vmem:[#allocation7 + $0x28] sm:$0xff]
    %v177 = vld [vmem:[#allocation7 + $0x30] sm:$0xff]
    %v178 = vld [vmem:[#allocation7 + $0x38] sm:$0xff]
    %v179 = vld [vmem:[#allocation7 + $0x40] sm:$0xff]
    %v180 = vld [vmem:[#allocation7 + $0x48] sm:$0xff]
    %v181 = vld [vmem:[#allocation7 + $0x50] sm:$0xff]
    %v182 = vld [vmem:[#allocation7 + $0x58] sm:$0xff]
    %v183 = vld [vmem:[#allocation7 + $0x60] sm:$0xff]
    %v184 = vld [vmem:[#allocation7 + $0x68] sm:$0xff]
    %v185 = vld [vmem:[#allocation7 + $0x70] sm:$0xff]
    %v186 = vld [vmem:[#allocation7 + $0x78] sm:$0xff]
    %v187 = vld [vmem:[%s4] sm:$0x1]
    %v189 = vlaneseq
    %v190 = vshrl.u32 %v189, 7
    %v191 = vsub.s32 0, %v190
    %v192 = vrot.slane %v187, %v191
    %194 = vmatprep.subr.mxu0 0.0
    %195 = vmatpush1.msra.mxu0 %v186
    %196 = vmatprep.subr.mxu0 0.0
    %197 = vmatpush1.msra.mxu0 %v185
    %198 = vmatprep.subr.mxu0 0.0
    %199 = vmatpush1.msra.mxu0 %v184
    %200 = vmatprep.subr.mxu0 0.0
    %201 = vmatpush1.msra.mxu0 %v183
    %202 = vmatprep.subr.mxu0 0.0
    %203 = vmatpush1.msra.mxu0 %v182
    %204 = vmatprep.subr.mxu0 0.0
    %205 = vmatpush1.msra.mxu0 %v181
    %206 = vmatprep.subr.mxu0 0.0
    %207 = vmatpush1.msra.mxu0 %v180
    %208 = vmatprep.subr.mxu0 0.0
    %209 = vmatpush1.msra.mxu0 %v179
    %210 = vmatprep.subr.mxu0 0.0
    %211 = vmatpush1.msra.mxu0 %v178
    %212 = vmatprep.subr.mxu0 0.0
    %213 = vmatpush1.msra.mxu0 %v177
    %214 = vmatprep.subr.mxu0 0.0
    %215 = vmatpush1.msra.mxu0 %v176
    %216 = vmatprep.subr.mxu0 0.0
    %217 = vmatpush1.msra.mxu0 %v175
    %218 = vmatprep.subr.mxu0 0.0
    %219 = vmatpush1.msra.mxu0 %v174
    %220 = vmatprep.subr.mxu0 0.0
    %221 = vmatpush1.msra.mxu0 %v173
    %222 = vmatprep.subr.mxu0 0.0
    %223 = vmatpush1.msra.mxu0 %v172
    %224 = vmatprep.subr.mxu0 0.0
    %225 = vmatpush1.msra.mxu0 %v171
    %226 = vmatprep.subr.mxu0 0.0
    %227 = vmatpush2.msra.mxu0 0.0
    %228 = vmatprep.subr.mxu0 0.0
    %229 = vmatpush2.msra.mxu0 0.0
    %230 = vmatprep.subr.mxu0 0.0
    %231 = vmatpush2.msra.mxu0 0.0
    %232 = vmatprep.subr.mxu0 0.0
    %233 = vmatpush2.msra.mxu0 0.0
    %234 = vmatprep.subr.mxu0 0.0
    %235 = vmatpush2.msra.mxu0 0.0
    %236 = vmatprep.subr.mxu0 0.0
    %237 = vmatpush2.msra.mxu0 0.0
    %238 = vmatprep.subr.mxu0 0.0
    %239 = vmatpush2.msra.mxu0 0.0
    %240 = vmatprep.subr.mxu0 0.0
    %241 = vmatpush2.msra.mxu0 0.0
    %242 = vmatprep.subr.mxu0 0.0
    %243 = vmatpush2.msra.mxu0 0.0
    %244 = vmatprep.subr.mxu0 0.0
    %245 = vmatpush2.msra.mxu0 0.0
    %246 = vmatprep.subr.mxu0 0.0
    %247 = vmatpush2.msra.mxu0 0.0
    %248 = vmatprep.subr.mxu0 0.0
    %249 = vmatpush2.msra.mxu0 0.0
    %250 = vmatprep.subr.mxu0 0.0
    %251 = vmatpush2.msra.mxu0 0.0
    %252 = vmatprep.subr.mxu0 0.0
    %253 = vmatpush2.msra.mxu0 0.0
    %254 = vmatprep.subr.mxu0 0.0
    %255 = vmatpush2.msra.mxu0 0.0
    %256 = vmatprep.subr.mxu0 0.0
    %257 = vmatpush2.msra.mxu0 0.0
    %258 = vmatprep.mubr.f32.mxu0 0.0
    %259 = vmatmul.mubr.f32.gmra.mxu0 %v170
    %v260 = vpop.f32.mrf.mxu0
    %v261 = vadd.f32 %v192, %v260
    %v262 = vpop.f32.mrf.mxu0
    %263 = vdwg.mxu0
    %v264 = vmax.f32 %v261, 0.0
    %v265 = vld [vmem:[#allocation8] sm:$0xff]
    %v266 = vld [vmem:[#allocation8 + $0x8] sm:$0xff]
    %v267 = vld [vmem:[#allocation8 + $0x10] sm:$0xff]
    %v268 = vld [vmem:[#allocation8 + $0x18] sm:$0xff]
    %v269 = vld [vmem:[#allocation8 + $0x20] sm:$0xff]
    %v270 = vld [vmem:[#allocation8 + $0x28] sm:$0xff]
    %v271 = vld [vmem:[#allocation8 + $0x30] sm:$0xff]
    %v272 = vld [vmem:[#allocation8 + $0x38] sm:$0xff]
    %v273 = vld [vmem:[#allocation8 + $0x40] sm:$0xff]
    %v274 = vld [vmem:[#allocation8 + $0x48] sm:$0xff]
    %v275 = vld [vmem:[#allocation8 + $0x50] sm:$0xff]
    %v276 = vld [vmem:[#allocation8 + $0x58] sm:$0xff]
    %v277 = vld [vmem:[#allocation8 + $0x60] sm:$0xff]
    %v278 = vld [vmem:[#allocation8 + $0x68] sm:$0xff]
    %v279 = vld [vmem:[#allocation8 + $0x70] sm:$0xff]
    %v280 = vld [vmem:[#allocation8 + $0x78] sm:$0xff]
    %v281 = vld [vmem:[%s6] sm:$0x1]
    %v283 = vlaneseq
    %v284 = vshrl.u32 %v283, 7
    %v285 = vsub.s32 0, %v284
    %v286 = vrot.slane %v281, %v285
    %288 = vmatprep.subr.mxu0 0.0
    %289 = vmatpush1.msra.mxu0 %v280
    %290 = vmatprep.subr.mxu0 0.0
    %291 = vmatpush1.msra.mxu0 %v279
    %292 = vmatprep.subr.mxu0 0.0
    %293 = vmatpush1.msra.mxu0 %v278
    %294 = vmatprep.subr.mxu0 0.0
    %295 = vmatpush1.msra.mxu0 %v277
    %296 = vmatprep.subr.mxu0 0.0
    %297 = vmatpush1.msra.mxu0 %v276
    %298 = vmatprep.subr.mxu0 0.0
    %299 = vmatpush1.msra.mxu0 %v275
    %300 = vmatprep.subr.mxu0 0.0
    %301 = vmatpush1.msra.mxu0 %v274
    %302 = vmatprep.subr.mxu0 0.0
    %303 = vmatpush1.msra.mxu0 %v273
    %304 = vmatprep.subr.mxu0 0.0
    %305 = vmatpush1.msra.mxu0 %v272
    %306 = vmatprep.subr.mxu0 0.0
    %307 = vmatpush1.msra.mxu0 %v271
    %308 = vmatprep.subr.mxu0 0.0
    %309 = vmatpush1.msra.mxu0 %v270
    %310 = vmatprep.subr.mxu0 0.0
    %311 = vmatpush1.msra.mxu0 %v269
    %312 = vmatprep.subr.mxu0 0.0
    %313 = vmatpush1.msra.mxu0 %v268
    %314 = vmatprep.subr.mxu0 0.0
    %315 = vmatpush1.msra.mxu0 %v267
    %316 = vmatprep.subr.mxu0 0.0
    %317 = vmatpush1.msra.mxu0 %v266
    %318 = vmatprep.subr.mxu0 0.0
    %319 = vmatpush1.msra.mxu0 %v265
    %320 = vmatprep.subr.mxu0 0.0
    %321 = vmatpush2.msra.mxu0 0.0
    %322 = vmatprep.subr.mxu0 0.0
    %323 = vmatpush2.msra.mxu0 0.0
    %324 = vmatprep.subr.mxu0 0.0
    %325 = vmatpush2.msra.mxu0 0.0
    %326 = vmatprep.subr.mxu0 0.0
    %327 = vmatpush2.msra.mxu0 0.0
    %328 = vmatprep.subr.mxu0 0.0
    %329 = vmatpush2.msra.mxu0 0.0
    %330 = vmatprep.subr.mxu0 0.0
    %331 = vmatpush2.msra.mxu0 0.0
    %332 = vmatprep.subr.mxu0 0.0
    %333 = vmatpush2.msra.mxu0 0.0
    %334 = vmatprep.subr.mxu0 0.0
    %335 = vmatpush2.msra.mxu0 0.0
    %336 = vmatprep.subr.mxu0 0.0
    %337 = vmatpush2.msra.mxu0 0.0
    %338 = vmatprep.subr.mxu0 0.0
    %339 = vmatpush2.msra.mxu0 0.0
    %340 = vmatprep.subr.mxu0 0.0
    %341 = vmatpush2.msra.mxu0 0.0
    %342 = vmatprep.subr.mxu0 0.0
    %343 = vmatpush2.msra.mxu0 0.0
    %344 = vmatprep.subr.mxu0 0.0
    %345 = vmatpush2.msra.mxu0 0.0
    %346 = vmatprep.subr.mxu0 0.0
    %347 = vmatpush2.msra.mxu0 0.0
    %348 = vmatprep.subr.mxu0 0.0
    %349 = vmatpush2.msra.mxu0 0.0
    %350 = vmatprep.subr.mxu0 0.0
    %351 = vmatpush2.msra.mxu0 0.0
    %352 = vmatprep.mubr.f32.mxu0 0.0
    %353 = vmatmul.mubr.f32.gmra.mxu0 %v264
    %v354 = vpop.f32.mrf.mxu0
    %v355 = vadd.f32 %v286, %v354
    %v356 = vpop.f32.mrf.mxu0
    %357 = vdwg.mxu0
    %v358 = vld [vmem:[%s7] sm:$0x1]
    %v360 = vlaneseq
    %v361 = vshrl.u32 %v360, 7
    %v362 = vsub.s32 0, %v361
    %v363 = vrot.slane %v358, %v362
    %v365 = vmax.f32 %v355, %v363
    %v366 = vld [vmem:[%s8] sm:$0x1]
    %v368 = vlaneseq
    %v369 = vshrl.u32 %v368, 7
    %v370 = vsub.s32 0, %v369
    %v371 = vrot.slane %v366, %v370
    %v373 = vmin.f32 %v365, %v371
    %374 = vst [vmem:[#allocation10] sm:$0xff] %v373
    // Predicated region
    $region54: #{tpu_custom_call.1} parent=1 // pred_check
      _
    $region55: #{tpu_custom_call.1} parent=1 // pred_check_branch
      %376 = sbr.rel (0) target = $region57
    $region56: #{tpu_custom_call.1} parent=1 // pred_region
      %s378 = ssub.s32 128, 128
      %379 = vsyncadd [#allocation4], %s378
      %s381 = sshll.u32 [#allocation10], 4
      %s382 = int_to_ptr.vmem [resolvable:$true] %s381
      %384 = dma.vmem_to_hbm [thread:$0]  %s382, 128, %s9, [#allocation4]
    $region57: #{tpu_custom_call.1} parent=1 // pred_fallthru
      _
    // Predicated region
    $region58: #{tpu_custom_call.1} parent=1 // pred_check
      _
    $region59: #{tpu_custom_call.1} parent=1 // pred_check_branch
      %386 = sbr.rel (0) target = $region61
    $region60: #{tpu_custom_call.1} parent=1 // pred_region
      %387 = dma.done [#allocation4], 128
    $region61: #{tpu_custom_call.1} parent=1 // pred_fallthru
      _
    %388 = vsyncpa [#allocation3], 1
    %389 = vsyncpa [#allocation6], 1
    %390 = vsyncpa [#allocation9], 1
    %391 = vsyncpa [#allocation4], 1

</llo_original>
